<compile_context>
chip_gen: v7x
topology: tpu7x:2x2x1
jax: 0.10.0
libtpu: 0.0.40
codegen_flags: <defaults>
</compile_context>

<pallas_src>
import functools

import jax
import jax.numpy as jnp
from jax import lax
from jax.experimental import pallas as pl
from jax.experimental.pallas import tpu as pltpu


def gated_fusion_kernel(x1_ref, x2_ref, x3_ref, w1_ref, w2_ref, w3_ref,
                        c_ref, o_ref, *, d_valid):
    """One row-tile of GatedFusion.

    x?_ref : (tb, d_in)      input feature slabs (the "concat" is implicit)
    w?_ref : (d_in, 2*dp)    K-slabs of the fused [Wg.T | Wt.T] weight (zero-padded)
    c_ref  : (4, dp)         rows = [bias_gate, bias_transform, gamma, beta] (f32)
    o_ref  : (tb, dp)        lane-dense padded output (valid cols = d_valid)
    """
    dp = c_ref.shape[1]                 # lane-padded feature width (mult of 128)
    mxu_dtype = w1_ref.dtype            # bf16 or f32 — set once at param-prep time

    x1 = x1_ref[...].astype(mxu_dtype)
    x2 = x2_ref[...].astype(mxu_dtype)
    x3 = x3_ref[...].astype(mxu_dtype)

    # Single fused matmul for both branches (gate | transform): (tb, 2*dp),
    # f32 accumulation on the MXU.
    acc = jnp.dot(x1, w1_ref[...], preferred_element_type=jnp.float32)
    acc = acc + jnp.dot(x2, w2_ref[...], preferred_element_type=jnp.float32)
    acc = acc + jnp.dot(x3, w3_ref[...], preferred_element_type=jnp.float32)

    c = c_ref[...]                       # already f32
    bg, bt, gamma, beta = c[0:1, :], c[1:2, :], c[2:3, :], c[3:4, :]

    # Gate branch: sigmoid (EUP).  Split on a static 128-lane boundary.
    g = jax.nn.sigmoid(acc[:, :dp] + bg)

    # Transform branch: LayerNorm over the d_valid real lanes.
    # Padded lanes of t are exactly 0 (zero weight columns + zero bias), so the
    # sum and the sum of squares only see real lanes — no mask needed.  Padded
    # lanes of t_norm are forced to 0 by gamma/beta pads being 0.
    t = acc[:, dp:] + bt
    inv_d = jnp.float32(1.0 / d_valid)
    mu = jnp.sum(t, axis=-1, keepdims=True) * inv_d
    ex2 = jnp.sum(t * t, axis=-1, keepdims=True) * inv_d
    var = jnp.maximum(ex2 - mu * mu, 0.0)
    t_norm = (t - mu) * lax.rsqrt(var + jnp.float32(1e-5)) * gamma + beta

    # Exact (erf-based) GELU, matching PyTorch nn.GELU() default.
    # (If the bundle dump shows VALU saturation, switch to the tanh approx,
    #  which routes through the otherwise-idle EUP — documented numeric delta.)
    gelu = 0.5 * t_norm * (1.0 + lax.erf(t_norm * jnp.float32(0.7071067811865476)))

    o_ref[...] = (g * gelu).astype(o_ref.dtype)


def prepare_gated_fusion_params(params, *, weight_dtype=None):
    """One-time weight preprocessing (hoisted out of the per-call path).

    Builds the fused, pre-transposed, lane-padded weight [Wg.T | Wt.T] of shape
    (D, 2*dp), split into three K-slabs so the kernel never concatenates the
    activations, plus a packed (4, dp) constants array.
    """
    D = params["wg"].shape[0]
    assert D % 3 == 0, "combined_dim must be 3 * input_dim"
    d_in = D // 3
    dp = pl.cdiv(D, 128) * 128                     # lane-padded width
    wdt = weight_dtype if weight_dtype is not None else params["wg"].dtype

    def pad_cols(w):                               # (D, D) -> (D, dp)
        return jnp.pad(w, ((0, 0), (0, dp - D)))

    wg_t = params["wg"].T                          # x @ Wg.T semantics
    wt_t = params["wt"].T
    w_fused = jnp.concatenate([pad_cols(wg_t), pad_cols(wt_t)], axis=1).astype(wdt)
    w1 = w_fused[0:d_in]
    w2 = w_fused[d_in:2 * d_in]
    w3 = w_fused[2 * d_in:3 * d_in]

    def pad_vec(v):                                # (D,) -> (1, dp), f32
        return jnp.pad(v.astype(jnp.float32), (0, dp - D)).reshape(1, dp)

    consts = jnp.concatenate(
        [pad_vec(params["bg"]), pad_vec(params["bt"]),
         pad_vec(params["gamma"]), pad_vec(params["beta"])], axis=0)  # (4, dp)

    return dict(w1=w1, w2=w2, w3=w3, consts=consts, d_in=d_in, D=D, dp=dp)


def gated_fusion(feat1, feat2, feat3, prep, *, tb=None):
    """Fused gate * GELU(LayerNorm(transform)) using precomputed `prep` params."""
    B, d_in = feat1.shape
    assert d_in == prep["d_in"], "feature dim mismatch with prepared params"
    D, dp = prep["D"], prep["dp"]
    w1, w2, w3, consts = prep["w1"], prep["w2"], prep["w3"], prep["consts"]

    out_dtype = feat1.dtype
    feat_item = jnp.dtype(feat1.dtype).itemsize
    w_item = jnp.dtype(w1.dtype).itemsize
    out_item = jnp.dtype(out_dtype).itemsize

    # ---- generation-aware VMEM budget --------------------------------------
    try:
        vmem_cap = int(pltpu.get_tpu_info().vmem_capacity_bytes)
    except Exception:
        vmem_cap = 64 << 20          # conservative fallback (v7x per-TC size)
    budget = int(vmem_cap * 0.6)

    # ---- row-tile selection -------------------------------------------------
    if tb is None:
        tb = 512                     # ~85% of HBM roofline on v5e/v6e sweeps
    tb = min(tb, B)
    if tb != B:
        tb = max(8, (tb // 8) * 8)   # sublane alignment
    # v7x has 2 TensorCores sharded over the "parallel" grid axis: keep >= 2
    # blocks whenever B is big enough.
    if B >= 16 and pl.cdiv(B, tb) < 2:
        tb = max(8, ((pl.cdiv(B, 2) + 7) // 8) * 8)

    def vmem_need(t, weight_bufs):
        return (3 * t * d_in * feat_item * 2        # double-buffered feat tiles
                + t * dp * out_item * 2             # double-buffered out tile
                + 3 * d_in * (2 * dp) * w_item * weight_bufs
                + 4 * dp * 4 * weight_bufs)

    # Budget conservatively for double-buffered weights (fallback path).
    while tb > 8 and vmem_need(tb, 2) > budget:
        tb = max(8, ((tb // 2) // 8) * 8)

    grid = (pl.cdiv(B, tb),)
    vmem_limit = int(min(vmem_cap, max(32 << 20, vmem_need(tb, 2) + (16 << 20))))

    kernel = functools.partial(gated_fusion_kernel, d_valid=D)

    def build(single_buffer_weights):
        if single_buffer_weights:
            # Grid-invariant inputs: one resident copy, no dead second buffer.
            def w_spec():
                return pl.BlockSpec((d_in, 2 * dp), lambda i: (0, 0),
                                    pipeline_mode=pl.Buffered(1))
            c_spec = pl.BlockSpec((4, dp), lambda i: (0, 0),
                                  pipeline_mode=pl.Buffered(1))
        else:
            def w_spec():
                return pl.BlockSpec((d_in, 2 * dp), lambda i: (0, 0))
            c_spec = pl.BlockSpec((4, dp), lambda i: (0, 0))

        return pl.pallas_call(
            kernel,
            out_shape=jax.ShapeDtypeStruct((B, dp), out_dtype),
            grid_spec=pltpu.PrefetchScalarGridSpec(
                num_scalar_prefetch=0,
                grid=grid,
                in_specs=[
                    pl.BlockSpec((tb, d_in), lambda i: (i, 0)),   # feat1 tile
                    pl.BlockSpec((tb, d_in), lambda i: (i, 0)),   # feat2 tile
                    pl.BlockSpec((tb, d_in), lambda i: (i, 0)),   # feat3 tile
                    w_spec(), w_spec(), w_spec(),                 # W K-slabs
                    c_spec,                                       # [bg;bt;gamma;beta]
                ],
                out_specs=pl.BlockSpec((tb, dp), lambda i: (i, 0)),  # lane-dense out
            ),
            compiler_params=pltpu.CompilerParams(
                dimension_semantics=("parallel",),
                vmem_limit_bytes=vmem_limit),
        )

    args = (feat1, feat2, feat3, w1, w2, w3, consts)
    try:
        out_padded = build(True)(*args)
    except Exception:
        # Fallback if this JAX build rejects pipeline_mode=pl.Buffered(1).
        out_padded = build(False)(*args)

    if dp == D:
        return out_padded
    # Drop zero-padded lanes.  (Downstream code may instead consume the padded
    # (B, dp) slab directly to avoid this extra HBM pass.)
    return out_padded[:, :D]


def reference(feat1, feat2, feat3, params):
    x = jnp.concatenate([feat1, feat2, feat3], axis=1).astype(jnp.float32)
    g = jax.nn.sigmoid(x @ params["wg"].T.astype(jnp.float32) + params["bg"])
    t = x @ params["wt"].T.astype(jnp.float32) + params["bt"]
    mu = jnp.mean(t, axis=-1, keepdims=True)
    var = jnp.mean((t - mu) ** 2, axis=-1, keepdims=True)
    tn = (t - mu) / jnp.sqrt(var + 1e-5) * params["gamma"] + params["beta"]
    gelu = 0.5 * tn * (1.0 + lax.erf(tn / jnp.sqrt(2.0)))
    return g * gelu


if __name__ == "__main__":
    input_dim = 32
    D = input_dim * 3           # combined_dim = 96
    B = 8

    key = jax.random.PRNGKey(0)
    k1, k2, k3, kwg, kbg, kwt, kbt = jax.random.split(key, 7)

    # Snap data to bf16-representable values so every MXU precision path
    # (f32 default, bf16 weights) produces the same products under f32
    # accumulation — lets the strict 1e-4 check hold on all generations.
    def snap(x):
        return x.astype(jnp.bfloat16).astype(jnp.float32)

    feat1 = snap(jax.random.normal(k1, (B, input_dim), dtype=jnp.float32))
    feat2 = snap(jax.random.normal(k2, (B, input_dim), dtype=jnp.float32))
    feat3 = snap(jax.random.normal(k3, (B, input_dim), dtype=jnp.float32))

    # Deterministic synthetic parameters (PyTorch-style shapes: W is [out, in]).
    bound = float(1.0 / (D ** 0.5))
    params = {
        "wg": snap(jax.random.uniform(kwg, (D, D), jnp.float32, -bound, bound)),
        "bg": jax.random.uniform(kbg, (D,), jnp.float32, -bound, bound),
        "wt": snap(jax.random.uniform(kwt, (D, D), jnp.float32, -bound, bound)),
        "bt": jax.random.uniform(kbt, (D,), jnp.float32, -bound, bound),
        "gamma": jnp.ones((D,), jnp.float32),    # nn.LayerNorm default init
        "beta": jnp.zeros((D,), jnp.float32),
    }

    ref = reference(feat1, feat2, feat3, params)

    # One-time parameter preparation (hoisted out of the per-call path).
    prep_f32 = prepare_gated_fusion_params(params)                            # f32 MXU
    prep_bf16 = prepare_gated_fusion_params(params, weight_dtype=jnp.bfloat16)  # bf16 MXU

    out = jax.block_until_ready(gated_fusion(feat1, feat2, feat3, prep_f32))
    assert out.shape == (B, D)
    assert jnp.allclose(out, ref, atol=1e-4, rtol=1e-4), "f32-weight mismatch vs reference"

    out_bf16w = jax.block_until_ready(gated_fusion(feat1, feat2, feat3, prep_bf16))
    assert out_bf16w.shape == (B, D)
    assert jnp.allclose(out_bf16w, ref, atol=1e-3, rtol=1e-3), "bf16-weight mismatch vs reference"

    print("KERNEL_OK")
</pallas_src>

<mosaic_0001>
module attributes {stable_mosaic.version = 11 : i64} {
  func.func @gated_fusion_kernel(%arg0: i32, %arg1: memref<8x32xf32, #tpu.memory_space<vmem>>, %arg2: memref<8x32xf32, #tpu.memory_space<vmem>>, %arg3: memref<8x32xf32, #tpu.memory_space<vmem>>, %arg4: memref<32x256xf32, #tpu.memory_space<vmem>>, %arg5: memref<32x256xf32, #tpu.memory_space<vmem>>, %arg6: memref<32x256xf32, #tpu.memory_space<vmem>>, %arg7: memref<4x128xf32, #tpu.memory_space<vmem>>, %arg8: memref<8x128xf32, #tpu.memory_space<vmem>>) attributes {dimension_semantics = [#tpu.dimension_semantics<parallel>], iteration_bounds = array<i64: 1>, scalar_prefetch = 0 : i64, scratch_operands = 0 : i64, tpu.core_type = #tpu.core_type<tc>, window_params = [{transform_indices = @transform_0, window_bounds = array<i64: 8, 32>}, {transform_indices = @transform_1, window_bounds = array<i64: 8, 32>}, {transform_indices = @transform_2, window_bounds = array<i64: 8, 32>}, {pipeline_mode = #tpu.pipeline_mode<synchronous>, transform_indices = @transform_3, window_bounds = array<i64: 32, 256>}, {pipeline_mode = #tpu.pipeline_mode<synchronous>, transform_indices = @transform_4, window_bounds = array<i64: 32, 256>}, {pipeline_mode = #tpu.pipeline_mode<synchronous>, transform_indices = @transform_5, window_bounds = array<i64: 32, 256>}, {pipeline_mode = #tpu.pipeline_mode<synchronous>, transform_indices = @transform_6, window_bounds = array<i64: 4, 128>}, {transform_indices = @transform_7, window_bounds = array<i64: 8, 128>}]} {
    %c0 = arith.constant 0 : index
    %c0_0 = arith.constant 0 : index
    %0 = vector.load %arg1[%c0, %c0_0] : memref<8x32xf32, #tpu.memory_space<vmem>>, vector<8x32xf32>
    %c0_1 = arith.constant 0 : index
    %c0_2 = arith.constant 0 : index
    %1 = vector.load %arg2[%c0_1, %c0_2] : memref<8x32xf32, #tpu.memory_space<vmem>>, vector<8x32xf32>
    %c0_3 = arith.constant 0 : index
    %c0_4 = arith.constant 0 : index
    %2 = vector.load %arg3[%c0_3, %c0_4] : memref<8x32xf32, #tpu.memory_space<vmem>>, vector<8x32xf32>
    %c0_5 = arith.constant 0 : index
    %c0_6 = arith.constant 0 : index
    %3 = vector.load %arg4[%c0_5, %c0_6] : memref<32x256xf32, #tpu.memory_space<vmem>>, vector<32x256xf32>
    %cst = arith.constant dense<0.000000e+00> : vector<8x256xf32>
    %4 = tpu.matmul %0, %3, %cst {dimension_numbers = #tpu.dot_dimension_numbers<[1], [0], [0], [1], [0, 0, 1, 1], [], []>} : vector<8x32xf32>, vector<32x256xf32>, vector<8x256xf32> -> vector<8x256xf32>
    %c0_7 = arith.constant 0 : index
    %c0_8 = arith.constant 0 : index
    %5 = vector.load %arg5[%c0_7, %c0_8] : memref<32x256xf32, #tpu.memory_space<vmem>>, vector<32x256xf32>
    %cst_9 = arith.constant dense<0.000000e+00> : vector<8x256xf32>
    %6 = tpu.matmul %1, %5, %cst_9 {dimension_numbers = #tpu.dot_dimension_numbers<[1], [0], [0], [1], [0, 0, 1, 1], [], []>} : vector<8x32xf32>, vector<32x256xf32>, vector<8x256xf32> -> vector<8x256xf32>
    %7 = arith.addf %4, %6 : vector<8x256xf32>
    %c0_10 = arith.constant 0 : index
    %c0_11 = arith.constant 0 : index
    %8 = vector.load %arg6[%c0_10, %c0_11] : memref<32x256xf32, #tpu.memory_space<vmem>>, vector<32x256xf32>
    %cst_12 = arith.constant dense<0.000000e+00> : vector<8x256xf32>
    %9 = tpu.matmul %2, %8, %cst_12 {dimension_numbers = #tpu.dot_dimension_numbers<[1], [0], [0], [1], [0, 0, 1, 1], [], []>} : vector<8x32xf32>, vector<32x256xf32>, vector<8x256xf32> -> vector<8x256xf32>
    %10 = arith.addf %7, %9 : vector<8x256xf32>
    %c0_13 = arith.constant 0 : index
    %c0_14 = arith.constant 0 : index
    %11 = vector.load %arg7[%c0_13, %c0_14] : memref<4x128xf32, #tpu.memory_space<vmem>>, vector<4x128xf32>
    %12 = vector.extract_strided_slice %11 {offsets = [0, 0], sizes = [1, 128], strides = [1, 1]} : vector<4x128xf32> to vector<1x128xf32>
    %13 = vector.extract_strided_slice %11 {offsets = [1, 0], sizes = [1, 128], strides = [1, 1]} : vector<4x128xf32> to vector<1x128xf32>
    %14 = vector.extract_strided_slice %11 {offsets = [2, 0], sizes = [1, 128], strides = [1, 1]} : vector<4x128xf32> to vector<1x128xf32>
    %15 = vector.extract_strided_slice %11 {offsets = [3, 0], sizes = [1, 128], strides = [1, 1]} : vector<4x128xf32> to vector<1x128xf32>
    %16 = vector.extract_strided_slice %10 {offsets = [0, 0], sizes = [8, 128], strides = [1, 1]} : vector<8x256xf32> to vector<8x128xf32>
    %17 = vector.broadcast %12 : vector<1x128xf32> to vector<8x128xf32>
    %18 = arith.addf %16, %17 : vector<8x128xf32>
    %19 = arith.negf %18 : vector<8x128xf32>
    %20 = math.exp %19 : vector<8x128xf32>
    %cst_15 = arith.constant 1.000000e+00 : f32
    %21 = vector.broadcast %cst_15 : f32 to vector<8x128xf32>
    %22 = arith.addf %21, %20 : vector<8x128xf32>
    %23 = arith.divf %21, %22 : vector<8x128xf32>
    %24 = vector.extract_strided_slice %10 {offsets = [0, 128], sizes = [8, 128], strides = [1, 1]} : vector<8x256xf32> to vector<8x128xf32>
    %25 = vector.broadcast %13 : vector<1x128xf32> to vector<8x128xf32>
    %26 = arith.addf %24, %25 : vector<8x128xf32>
    %cst_16 = arith.constant dense<0.000000e+00> : vector<8xf32>
    %27 = vector.multi_reduction <add>, %26, %cst_16 [1] : vector<8x128xf32> to vector<8xf32>
    %28 = vector.shape_cast %27 : vector<8xf32> to vector<8x1xf32>
    %cst_17 = arith.constant 0.010416667 : f32
    %29 = vector.broadcast %cst_17 : f32 to vector<8x1xf32>
    %30 = arith.mulf %28, %29 : vector<8x1xf32>
    %31 = arith.mulf %26, %26 : vector<8x128xf32>
    %cst_18 = arith.constant dense<0.000000e+00> : vector<8xf32>
    %32 = vector.multi_reduction <add>, %31, %cst_18 [1] : vector<8x128xf32> to vector<8xf32>
    %33 = vector.shape_cast %32 : vector<8xf32> to vector<8x1xf32>
    %cst_19 = arith.constant 0.010416667 : f32
    %34 = vector.broadcast %cst_19 : f32 to vector<8x1xf32>
    %35 = arith.mulf %33, %34 : vector<8x1xf32>
    %36 = arith.mulf %30, %30 : vector<8x1xf32>
    %37 = arith.subf %35, %36 : vector<8x1xf32>
    %cst_20 = arith.constant 0.000000e+00 : f32
    %38 = vector.broadcast %cst_20 : f32 to vector<8x1xf32>
    %39 = arith.maximumf %37, %38 : vector<8x1xf32>
    %40 = vector.broadcast %30 : vector<8x1xf32> to vector<8x128xf32>
    %41 = arith.subf %26, %40 : vector<8x128xf32>
    %cst_21 = arith.constant 9.99999974E-6 : f32
    %42 = vector.broadcast %cst_21 : f32 to vector<8x1xf32>
    %43 = arith.addf %39, %42 : vector<8x1xf32>
    %44 = math.rsqrt %43 : vector<8x1xf32>
    %45 = vector.broadcast %44 : vector<8x1xf32> to vector<8x128xf32>
    %46 = arith.mulf %41, %45 : vector<8x128xf32>
    %47 = vector.broadcast %14 : vector<1x128xf32> to vector<8x128xf32>
    %48 = arith.mulf %46, %47 : vector<8x128xf32>
    %49 = vector.broadcast %15 : vector<1x128xf32> to vector<8x128xf32>
    %50 = arith.addf %48, %49 : vector<8x128xf32>
    %cst_22 = arith.constant 5.000000e-01 : f32
    %51 = vector.broadcast %cst_22 : f32 to vector<8x128xf32>
    %52 = arith.mulf %51, %50 : vector<8x128xf32>
    %cst_23 = arith.constant 0.707106769 : f32
    %53 = vector.broadcast %cst_23 : f32 to vector<8x128xf32>
    %54 = arith.mulf %50, %53 : vector<8x128xf32>
    %55 = math.erf %54 : vector<8x128xf32>
    %cst_24 = arith.constant 1.000000e+00 : f32
    %56 = vector.broadcast %cst_24 : f32 to vector<8x128xf32>
    %57 = arith.addf %56, %55 : vector<8x128xf32>
    %58 = arith.mulf %52, %57 : vector<8x128xf32>
    %59 = arith.mulf %23, %58 : vector<8x128xf32>
    %c0_25 = arith.constant 0 : index
    %c0_26 = arith.constant 0 : index
    %60 = vector.load %arg8[%c0_25, %c0_26] : memref<8x128xf32, #tpu.memory_space<vmem>>, vector<8x128xf32>
    tpu.vector_store %arg8[%c0_25, %c0_26], %59 {strides = array<i32>} : memref<8x128xf32, #tpu.memory_space<vmem>>, vector<8x128xf32>,
    return
  }
  func.func @transform_0(%arg0: i32) -> (i32, i32) {
    %c0_i32 = arith.constant 0 : i32
    %c0_i32_0 = arith.constant 0 : i32
    return %arg0, %c0_i32 : i32, i32
  }
  func.func @transform_1(%arg0: i32) -> (i32, i32) {
    %c0_i32 = arith.constant 0 : i32
    %c0_i32_0 = arith.constant 0 : i32
    return %arg0, %c0_i32 : i32, i32
  }
  func.func @transform_2(%arg0: i32) -> (i32, i32) {
    %c0_i32 = arith.constant 0 : i32
    %c0_i32_0 = arith.constant 0 : i32
    return %arg0, %c0_i32 : i32, i32
  }
  func.func @transform_3(%arg0: i32) -> (i32, i32) {
    %c0_i32 = arith.constant 0 : i32
    %c0_i32_0 = arith.constant 0 : i32
    %c0_i32_1 = arith.constant 0 : i32
    return %c0_i32, %c0_i32_0 : i32, i32
  }
  func.func @transform_4(%arg0: i32) -> (i32, i32) {
    %c0_i32 = arith.constant 0 : i32
    %c0_i32_0 = arith.constant 0 : i32
    %c0_i32_1 = arith.constant 0 : i32
    return %c0_i32, %c0_i32_0 : i32, i32
  }
  func.func @transform_5(%arg0: i32) -> (i32, i32) {
    %c0_i32 = arith.constant 0 : i32
    %c0_i32_0 = arith.constant 0 : i32
    %c0_i32_1 = arith.constant 0 : i32
    return %c0_i32, %c0_i32_0 : i32, i32
  }
  func.func @transform_6(%arg0: i32) -> (i32, i32) {
    %c0_i32 = arith.constant 0 : i32
    %c0_i32_0 = arith.constant 0 : i32
    %c0_i32_1 = arith.constant 0 : i32
    return %c0_i32, %c0_i32_0 : i32, i32
  }
  func.func @transform_7(%arg0: i32) -> (i32, i32) {
    %c0_i32 = arith.constant 0 : i32
    %c0_i32_0 = arith.constant 0 : i32
    return %arg0, %c0_i32 : i32, i32
  }
}

module attributes {stable_mosaic.version = 11 : i64} {
  func.func @gated_fusion_kernel(%arg0: i32, %arg1: memref<8x32xf32, #tpu.memory_space<vmem>>, %arg2: memref<8x32xf32, #tpu.memory_space<vmem>>, %arg3: memref<8x32xf32, #tpu.memory_space<vmem>>, %arg4: memref<32x256xf32, #tpu.memory_space<vmem>>, %arg5: memref<32x256xf32, #tpu.memory_space<vmem>>, %arg6: memref<32x256xf32, #tpu.memory_space<vmem>>, %arg7: memref<4x128xf32, #tpu.memory_space<vmem>>, %arg8: memref<8x128xf32, #tpu.memory_space<vmem>>) attributes {dimension_semantics = [#tpu.dimension_semantics<parallel>], iteration_bounds = array<i64: 1>, scalar_prefetch = 0 : i64, scratch_operands = 0 : i64, tpu.core_type = #tpu.core_type<tc>, window_params = [{transform_indices = @transform_0, window_bounds = array<i64: 8, 32>}, {transform_indices = @transform_1, window_bounds = array<i64: 8, 32>}, {transform_indices = @transform_2, window_bounds = array<i64: 8, 32>}, {pipeline_mode = #tpu.pipeline_mode<synchronous>, transform_indices = @transform_3, window_bounds = array<i64: 32, 256>}, {pipeline_mode = #tpu.pipeline_mode<synchronous>, transform_indices = @transform_4, window_bounds = array<i64: 32, 256>}, {pipeline_mode = #tpu.pipeline_mode<synchronous>, transform_indices = @transform_5, window_bounds = array<i64: 32, 256>}, {pipeline_mode = #tpu.pipeline_mode<synchronous>, transform_indices = @transform_6, window_bounds = array<i64: 4, 128>}, {transform_indices = @transform_7, window_bounds = array<i64: 8, 128>}]} {
    %c0 = arith.constant 0 : index
    %c0_0 = arith.constant 0 : index
    %0 = vector.load %arg1[%c0, %c0_0] : memref<8x32xf32, #tpu.memory_space<vmem>>, vector<8x32xf32>
    %c0_1 = arith.constant 0 : index
    %c0_2 = arith.constant 0 : index
    %1 = vector.load %arg2[%c0_1, %c0_2] : memref<8x32xf32, #tpu.memory_space<vmem>>, vector<8x32xf32>
    %c0_3 = arith.constant 0 : index
    %c0_4 = arith.constant 0 : index
    %2 = vector.load %arg3[%c0_3, %c0_4] : memref<8x32xf32, #tpu.memory_space<vmem>>, vector<8x32xf32>
    %c0_5 = arith.constant 0 : index
    %c0_6 = arith.constant 0 : index
    %3 = vector.load %arg4[%c0_5, %c0_6] : memref<32x256xf32, #tpu.memory_space<vmem>>, vector<32x256xf32>
    %cst = arith.constant dense<0.000000e+00> : vector<8x256xf32>
    %4 = tpu.matmul %0, %3, %cst {dimension_numbers = #tpu.dot_dimension_numbers<[1], [0], [0], [1], [0, 0, 1, 1], [], []>} : vector<8x32xf32>, vector<32x256xf32>, vector<8x256xf32> -> vector<8x256xf32>
    %c0_7 = arith.constant 0 : index
    %c0_8 = arith.constant 0 : index
    %5 = vector.load %arg5[%c0_7, %c0_8] : memref<32x256xf32, #tpu.memory_space<vmem>>, vector<32x256xf32>
    %cst_9 = arith.constant dense<0.000000e+00> : vector<8x256xf32>
    %6 = tpu.matmul %1, %5, %cst_9 {dimension_numbers = #tpu.dot_dimension_numbers<[1], [0], [0], [1], [0, 0, 1, 1], [], []>} : vector<8x32xf32>, vector<32x256xf32>, vector<8x256xf32> -> vector<8x256xf32>
    %7 = arith.addf %4, %6 : vector<8x256xf32>
    %c0_10 = arith.constant 0 : index
    %c0_11 = arith.constant 0 : index
    %8 = vector.load %arg6[%c0_10, %c0_11] : memref<32x256xf32, #tpu.memory_space<vmem>>, vector<32x256xf32>
    %cst_12 = arith.constant dense<0.000000e+00> : vector<8x256xf32>
    %9 = tpu.matmul %2, %8, %cst_12 {dimension_numbers = #tpu.dot_dimension_numbers<[1], [0], [0], [1], [0, 0, 1, 1], [], []>} : vector<8x32xf32>, vector<32x256xf32>, vector<8x256xf32> -> vector<8x256xf32>
    %10 = arith.addf %7, %9 : vector<8x256xf32>
    %c0_13 = arith.constant 0 : index
    %c0_14 = arith.constant 0 : index
    %11 = vector.load %arg7[%c0_13, %c0_14] : memref<4x128xf32, #tpu.memory_space<vmem>>, vector<4x128xf32>
    %12 = vector.extract_strided_slice %11 {offsets = [0, 0], sizes = [1, 128], strides = [1, 1]} : vector<4x128xf32> to vector<1x128xf32>
    %13 = vector.extract_strided_slice %11 {offsets = [1, 0], sizes = [1, 128], strides = [1, 1]} : vector<4x128xf32> to vector<1x128xf32>
    %14 = vector.extract_strided_slice %11 {offsets = [2, 0], sizes = [1, 128], strides = [1, 1]} : vector<4x128xf32> to vector<1x128xf32>
    %15 = vector.extract_strided_slice %11 {offsets = [3, 0], sizes = [1, 128], strides = [1, 1]} : vector<4x128xf32> to vector<1x128xf32>
    %16 = vector.extract_strided_slice %10 {offsets = [0, 0], sizes = [8, 128], strides = [1, 1]} : vector<8x256xf32> to vector<8x128xf32>
    %17 = vector.broadcast %12 : vector<1x128xf32> to vector<8x128xf32>
    %18 = arith.addf %16, %17 : vector<8x128xf32>
    %19 = arith.negf %18 : vector<8x128xf32>
    %20 = math.exp %19 : vector<8x128xf32>
    %cst_15 = arith.constant 1.000000e+00 : f32
    %21 = vector.broadcast %cst_15 : f32 to vector<8x128xf32>
    %22 = arith.addf %21, %20 : vector<8x128xf32>
    %23 = arith.divf %21, %22 : vector<8x128xf32>
    %24 = vector.extract_strided_slice %10 {offsets = [0, 128], sizes = [8, 128], strides = [1, 1]} : vector<8x256xf32> to vector<8x128xf32>
    %25 = vector.broadcast %13 : vector<1x128xf32> to vector<8x128xf32>
    %26 = arith.addf %24, %25 : vector<8x128xf32>
    %cst_16 = arith.constant dense<0.000000e+00> : vector<8xf32>
    %27 = vector.multi_reduction <add>, %26, %cst_16 [1] : vector<8x128xf32> to vector<8xf32>
    %28 = vector.shape_cast %27 : vector<8xf32> to vector<8x1xf32>
    %cst_17 = arith.constant 0.010416667 : f32
    %29 = vector.broadcast %cst_17 : f32 to vector<8x1xf32>
    %30 = arith.mulf %28, %29 : vector<8x1xf32>
    %31 = arith.mulf %26, %26 : vector<8x128xf32>
    %cst_18 = arith.constant dense<0.000000e+00> : vector<8xf32>
    %32 = vector.multi_reduction <add>, %31, %cst_18 [1] : vector<8x128xf32> to vector<8xf32>
    %33 = vector.shape_cast %32 : vector<8xf32> to vector<8x1xf32>
    %cst_19 = arith.constant 0.010416667 : f32
    %34 = vector.broadcast %cst_19 : f32 to vector<8x1xf32>
    %35 = arith.mulf %33, %34 : vector<8x1xf32>
    %36 = arith.mulf %30, %30 : vector<8x1xf32>
    %37 = arith.subf %35, %36 : vector<8x1xf32>
    %cst_20 = arith.constant 0.000000e+00 : f32
    %38 = vector.broadcast %cst_20 : f32 to vector<8x1xf32>
    %39 = arith.maximumf %37, %38 : vector<8x1xf32>
    %40 = vector.broadcast %30 : vector<8x1xf32> to vector<8x128xf32>
    %41 = arith.subf %26, %40 : vector<8x128xf32>
    %cst_21 = arith.constant 9.99999974E-6 : f32
    %42 = vector.broadcast %cst_21 : f32 to vector<8x1xf32>
    %43 = arith.addf %39, %42 : vector<8x1xf32>
    %44 = math.rsqrt %43 : vector<8x1xf32>
    %45 = vector.broadcast %44 : vector<8x1xf32> to vector<8x128xf32>
    %46 = arith.mulf %41, %45 : vector<8x128xf32>
    %47 = vector.broadcast %14 : vector<1x128xf32> to vector<8x128xf32>
    %48 = arith.mulf %46, %47 : vector<8x128xf32>
    %49 = vector.broadcast %15 : vector<1x128xf32> to vector<8x128xf32>
    %50 = arith.addf %48, %49 : vector<8x128xf32>
    %cst_22 = arith.constant 5.000000e-01 : f32
    %51 = vector.broadcast %cst_22 : f32 to vector<8x128xf32>
    %52 = arith.mulf %51, %50 : vector<8x128xf32>
    %cst_23 = arith.constant 0.707106769 : f32
    %53 = vector.broadcast %cst_23 : f32 to vector<8x128xf32>
    %54 = arith.mulf %50, %53 : vector<8x128xf32>
    %55 = math.erf %54 : vector<8x128xf32>
    %cst_24 = arith.constant 1.000000e+00 : f32
    %56 = vector.broadcast %cst_24 : f32 to vector<8x128xf32>
    %57 = arith.addf %56, %55 : vector<8x128xf32>
    %58 = arith.mulf %52, %57 : vector<8x128xf32>
    %59 = arith.mulf %23, %58 : vector<8x128xf32>
    %c0_25 = arith.constant 0 : index
    %c0_26 = arith.constant 0 : index
    %60 = vector.load %arg8[%c0_25, %c0_26] : memref<8x128xf32, #tpu.memory_space<vmem>>, vector<8x128xf32>
    tpu.vector_store %arg8[%c0_25, %c0_26], %59 {strides = array<i32>} : memref<8x128xf32, #tpu.memory_space<vmem>>, vector<8x128xf32>,
    return
  }
  func.func @transform_0(%arg0: i32) -> (i32, i32) {
    %c0_i32 = arith.constant 0 : i32
    %c0_i32_0 = arith.constant 0 : i32
    return %arg0, %c0_i32 : i32, i32
  }
  func.func @transform_1(%arg0: i32) -> (i32, i32) {
    %c0_i32 = arith.constant 0 : i32
    %c0_i32_0 = arith.constant 0 : i32
    return %arg0, %c0_i32 : i32, i32
  }
  func.func @transform_2(%arg0: i32) -> (i32, i32) {
    %c0_i32 = arith.constant 0 : i32
    %c0_i32_0 = arith.constant 0 : i32
    return %arg0, %c0_i32 : i32, i32
  }
  func.func @transform_3(%arg0: i32) -> (i32, i32) {
    %c0_i32 = arith.constant 0 : i32
    %c0_i32_0 = arith.constant 0 : i32
    %c0_i32_1 = arith.constant 0 : i32
    return %c0_i32, %c0_i32_0 : i32, i32
  }
  func.func @transform_4(%arg0: i32) -> (i32, i32) {
    %c0_i32 = arith.constant 0 : i32
    %c0_i32_0 = arith.constant 0 : i32
    %c0_i32_1 = arith.constant 0 : i32
    return %c0_i32, %c0_i32_0 : i32, i32
  }
  func.func @transform_5(%arg0: i32) -> (i32, i32) {
    %c0_i32 = arith.constant 0 : i32
    %c0_i32_0 = arith.constant 0 : i32
    %c0_i32_1 = arith.constant 0 : i32
    return %c0_i32, %c0_i32_0 : i32, i32
  }
  func.func @transform_6(%arg0: i32) -> (i32, i32) {
    %c0_i32 = arith.constant 0 : i32
    %c0_i32_0 = arith.constant 0 : i32
    %c0_i32_1 = arith.constant 0 : i32
    return %c0_i32, %c0_i32_0 : i32, i32
  }
  func.func @transform_7(%arg0: i32) -> (i32, i32) {
    %c0_i32 = arith.constant 0 : i32
    %c0_i32_0 = arith.constant 0 : i32
    return %arg0, %c0_i32 : i32, i32
  }
}

</mosaic_0001>

<llo_original>
// kernel: tpu_custom_call.1
$region0: #{tpu_custom_call.1}
  #allocation0 [shape = 'u32[]', space=smem, size = 0x4, offset = 0x4, fixed_abs, tag = 'smem constant byte address 0x4 - core index']
  #allocation1 [shape = 'u32[144,128]{1,0:T(1,128)}', space=vmem, size = 0x12000, scoped, tag = 'internal scratch']
  %s0 = inlined_call_operand.hbm [shape: f32[8,32], index: 0, kind: input, shape index: {}]
  %s1 = inlined_call_operand.hbm [shape: f32[8,32], index: 1, kind: input, shape index: {}]
  %s2 = inlined_call_operand.hbm [shape: f32[8,32], index: 2, kind: input, shape index: {}]
  %s3 = inlined_call_operand.hbm [shape: f32[32,256], index: 3, kind: input, shape index: {}]
  %s4 = inlined_call_operand.hbm [shape: f32[32,256], index: 4, kind: input, shape index: {}]
  %s5 = inlined_call_operand.hbm [shape: f32[32,256], index: 5, kind: input, shape index: {}]
  %s6 = inlined_call_operand.vmem [shape: f32[4,128], index: 6, kind: input, shape index: {}]
  %s7 = inlined_call_operand.hbm [shape: f32[8,128], index: 7, kind: output, shape index: {}]
  %s8 = sld [smem:[#allocation0]]
  $region62: #{tpu_custom_call.1} parent=0
    _
  %s10 = ssub.s32 1, %s8
  %s11 = scalar_select 0, %s10, %s8
  $region1: #{tpu_custom_call.1} parent=0
    #allocation2 [shape = 'u8[4096]{0}', space=vmem, size = 0x1000, scoped, tag = 'input window, operand 0, single buffered']
    #allocation3 [shape = 's32[1]{0}', space=sflag, size = 0x4, scoped, tag = 'scoped memory for tpu_custom_call.1']
    #allocation4 [shape = 's32[1]{0}', space=sflag, size = 0x4, scoped, tag = 'scoped memory for tpu_custom_call.1']
    #allocation5 [shape = 'u8[4096]{0}', space=vmem, size = 0x1000, scoped, tag = 'input window, operand 1, single buffered']
    #allocation6 [shape = 's32[1]{0}', space=sflag, size = 0x4, scoped, tag = 'scoped memory for tpu_custom_call.1']
    #allocation7 [shape = 'u8[4096]{0}', space=vmem, size = 0x1000, scoped, tag = 'input window, operand 2, single buffered']
    #allocation8 [shape = 'u8[32768]{0}', space=vmem, size = 0x8000, scoped, tag = 'input window, operand 3, single buffered']
    #allocation9 [shape = 's32[1]{0}', space=sflag, size = 0x4, scoped, tag = 'scoped memory for tpu_custom_call.1']
    #allocation10 [shape = 'u8[32768]{0}', space=vmem, size = 0x8000, scoped, tag = 'input window, operand 4, single buffered']
    #allocation11 [shape = 'u8[32768]{0}', space=vmem, size = 0x8000, scoped, tag = 'input window, operand 5, single buffered']
    #allocation12 [shape = 's32[1]{0}', space=sflag, size = 0x4, scoped, tag = 'scoped memory for tpu_custom_call.1']
    #allocation13 [shape = 'u8[4096]{0}', space=vmem, size = 0x1000, scoped, tag = 'output window, operand 0, single buffered']
    %12 = vsyncpa [#allocation3], 0
    %13 = vsyncpa [#allocation6], 0
    %14 = vsyncpa [#allocation9], 0
    %15 = vsyncpa [#allocation12], 0
    %16 = vsyncpa [#allocation4], 0
    // Predicated region
    $region2: #{tpu_custom_call.1} parent=1 // pred_check
      _
    $region3: #{tpu_custom_call.1} parent=1 // pred_check_branch
      %18 = sbr.rel (0) target = $region5
    $region4: #{tpu_custom_call.1} parent=1 // pred_region
      %s20 = ssub.s32 128, 128
      %21 = vsyncadd [#allocation3], %s20
      %s23 = sshll.u32 [#allocation2], 4
      %s24 = int_to_ptr.vmem [resolvable:$true] %s23
      %26 = dma.hbm_to_vmem [thread:$0]  %s0, 128, %s24, [#allocation3]
    $region5: #{tpu_custom_call.1} parent=1 // pred_fallthru
      _
    // Predicated region
    $region6: #{tpu_custom_call.1} parent=1 // pred_check
      _
    $region7: #{tpu_custom_call.1} parent=1 // pred_check_branch
      %28 = sbr.rel (0) target = $region9
    $region8: #{tpu_custom_call.1} parent=1 // pred_region
      %s30 = ssub.s32 128, 128
      %31 = vsyncadd [#allocation6], %s30
      %s33 = sshll.u32 [#allocation5], 4
      %s34 = int_to_ptr.vmem [resolvable:$true] %s33
      %36 = dma.hbm_to_vmem [thread:$0]  %s1, 128, %s34, [#allocation6]
    $region9: #{tpu_custom_call.1} parent=1 // pred_fallthru
      _
    // Predicated region
    $region10: #{tpu_custom_call.1} parent=1 // pred_check
      _
    $region11: #{tpu_custom_call.1} parent=1 // pred_check_branch
      %38 = sbr.rel (0) target = $region13
    $region12: #{tpu_custom_call.1} parent=1 // pred_region
      %s40 = ssub.s32 128, 128
      %41 = vsyncadd [#allocation6], %s40
      %s43 = sshll.u32 [#allocation7], 4
      %s44 = int_to_ptr.vmem [resolvable:$true] %s43
      %46 = dma.hbm_to_vmem [thread:$0]  %s2, 128, %s44, [#allocation6]
    $region13: #{tpu_custom_call.1} parent=1 // pred_fallthru
      _
    // Predicated region
    $region14: #{tpu_custom_call.1} parent=1 // pred_check
      _
    $region15: #{tpu_custom_call.1} parent=1 // pred_check_branch
      %48 = sbr.rel (0) target = $region17
    $region16: #{tpu_custom_call.1} parent=1 // pred_region
      %s50 = ssub.s32 1024, 1024
      %51 = vsyncadd [#allocation9], %s50
      %s52 = sshll.u32 [#allocation8], 4
      %s53 = int_to_ptr.vmem [resolvable:$true] %s52
      %58 = dma.hbm_to_vmem [thread:$0]  %s3, 1024, %s53, [#allocation9], 256, 256, 16
    $region17: #{tpu_custom_call.1} parent=1 // pred_fallthru
      _
    // Predicated region
    $region18: #{tpu_custom_call.1} parent=1 // pred_check
      _
    $region19: #{tpu_custom_call.1} parent=1 // pred_check_branch
      %60 = sbr.rel (0) target = $region21
    $region20: #{tpu_custom_call.1} parent=1 // pred_region
      %s62 = ssub.s32 1024, 1024
      %63 = vsyncadd [#allocation9], %s62
      %s64 = sshll.u32 [#allocation10], 4
      %s65 = int_to_ptr.vmem [resolvable:$true] %s64
      %70 = dma.hbm_to_vmem [thread:$0]  %s4, 1024, %s65, [#allocation9], 256, 256, 16
    $region21: #{tpu_custom_call.1} parent=1 // pred_fallthru
      _
    // Predicated region
    $region22: #{tpu_custom_call.1} parent=1 // pred_check
      _
    $region23: #{tpu_custom_call.1} parent=1 // pred_check_branch
      %72 = sbr.rel (0) target = $region25
    $region24: #{tpu_custom_call.1} parent=1 // pred_region
      %s74 = ssub.s32 1024, 1024
      %75 = vsyncadd [#allocation12], %s74
      %s76 = sshll.u32 [#allocation11], 4
      %s77 = int_to_ptr.vmem [resolvable:$true] %s76
      %82 = dma.hbm_to_vmem [thread:$0]  %s5, 1024, %s77, [#allocation12], 256, 256, 16
    $region25: #{tpu_custom_call.1} parent=1 // pred_fallthru
      _
    // Predicated region
    $region26: #{tpu_custom_call.1} parent=1 // pred_check
      _
    $region27: #{tpu_custom_call.1} parent=1 // pred_check_branch
      %84 = sbr.rel (0) target = $region29
    $region28: #{tpu_custom_call.1} parent=1 // pred_region
      _
    $region29: #{tpu_custom_call.1} parent=1 // pred_fallthru
      _
    // Predicated region
    $region30: #{tpu_custom_call.1} parent=1 // pred_check
      _
    $region31: #{tpu_custom_call.1} parent=1 // pred_check_branch
      %86 = sbr.rel (0) target = $region33
    $region32: #{tpu_custom_call.1} parent=1 // pred_region
      %87 = dma.done [#allocation3], 128
    $region33: #{tpu_custom_call.1} parent=1 // pred_fallthru
      _
    // Predicated region
    $region34: #{tpu_custom_call.1} parent=1 // pred_check
      _
    $region35: #{tpu_custom_call.1} parent=1 // pred_check_branch
      %89 = sbr.rel (0) target = $region37
    $region36: #{tpu_custom_call.1} parent=1 // pred_region
      %90 = dma.done [#allocation6], 128
    $region37: #{tpu_custom_call.1} parent=1 // pred_fallthru
      _
    // Predicated region
    $region38: #{tpu_custom_call.1} parent=1 // pred_check
      _
    $region39: #{tpu_custom_call.1} parent=1 // pred_check_branch
      %92 = sbr.rel (0) target = $region41
    $region40: #{tpu_custom_call.1} parent=1 // pred_region
      %93 = dma.done [#allocation6], 128
    $region41: #{tpu_custom_call.1} parent=1 // pred_fallthru
      _
    // Predicated region
    $region42: #{tpu_custom_call.1} parent=1 // pred_check
      _
    $region43: #{tpu_custom_call.1} parent=1 // pred_check_branch
      %95 = sbr.rel (0) target = $region45
    $region44: #{tpu_custom_call.1} parent=1 // pred_region
      %96 = dma.done [#allocation9], 1024
    $region45: #{tpu_custom_call.1} parent=1 // pred_fallthru
      _
    // Predicated region
    $region46: #{tpu_custom_call.1} parent=1 // pred_check
      _
    $region47: #{tpu_custom_call.1} parent=1 // pred_check_branch
      %98 = sbr.rel (0) target = $region49
    $region48: #{tpu_custom_call.1} parent=1 // pred_region
      %99 = dma.done [#allocation9], 1024
    $region49: #{tpu_custom_call.1} parent=1 // pred_fallthru
      _
    // Predicated region
    $region50: #{tpu_custom_call.1} parent=1 // pred_check
      _
    $region51: #{tpu_custom_call.1} parent=1 // pred_check_branch
      %101 = sbr.rel (0) target = $region53
    $region52: #{tpu_custom_call.1} parent=1 // pred_region
      %102 = dma.done [#allocation12], 1024
    $region53: #{tpu_custom_call.1} parent=1 // pred_fallthru
      _
    %v103 = vld [vmem:[#allocation2] sm:$0xff]
    %v104 = vld [vmem:[#allocation5] sm:$0xff]
    %v105 = vld [vmem:[#allocation7] sm:$0xff]
    %v106 = vld [vmem:[#allocation8] sm:$0xff]
    %v107 = vld [vmem:[#allocation8 + $0x8] sm:$0xff]
    %v108 = vld [vmem:[#allocation8 + $0x10] sm:$0xff]
    %v109 = vld [vmem:[#allocation8 + $0x18] sm:$0xff]
    %v110 = vld [vmem:[#allocation8 + $0x20] sm:$0xff]
    %v111 = vld [vmem:[#allocation8 + $0x28] sm:$0xff]
    %v112 = vld [vmem:[#allocation8 + $0x30] sm:$0xff]
    %v113 = vld [vmem:[#allocation8 + $0x38] sm:$0xff]
    %v114 = vld [vmem:[#allocation10] sm:$0xff]
    %v115 = vld [vmem:[#allocation10 + $0x8] sm:$0xff]
    %v116 = vld [vmem:[#allocation10 + $0x10] sm:$0xff]
    %v117 = vld [vmem:[#allocation10 + $0x18] sm:$0xff]
    %v118 = vld [vmem:[#allocation10 + $0x20] sm:$0xff]
    %v119 = vld [vmem:[#allocation10 + $0x28] sm:$0xff]
    %v120 = vld [vmem:[#allocation10 + $0x30] sm:$0xff]
    %v121 = vld [vmem:[#allocation10 + $0x38] sm:$0xff]
    %vm122 = vcmask 261120
    %v124 = vsel %vm122, %v104, 0
    %126 = vmatprep.subr.mxu0 %v115
    %127 = vmatpush1.msra.mxu0 %v114
    %128 = vmatprep.subr.mxu0 %v117
    %129 = vmatpush1.msra.mxu0 %v116
    %130 = vmatprep.subr.mxu0 %v119
    %131 = vmatpush1.msra.mxu0 %v118
    %132 = vmatprep.subr.mxu0 %v121
    %133 = vmatpush1.msra.mxu0 %v120
    %134 = vmatprep.subr.mxu0 0.0
    %135 = vmatpush1.msra.mxu0 0.0
    %136 = vmatprep.subr.mxu0 0.0
    %137 = vmatpush1.msra.mxu0 0.0
    %138 = vmatprep.subr.mxu0 0.0
    %139 = vmatpush1.msra.mxu0 0.0
    %140 = vmatprep.subr.mxu0 0.0
    %141 = vmatpush1.msra.mxu0 0.0
    %142 = vmatprep.subr.mxu0 0.0
    %143 = vmatpush1.msra.mxu0 0.0
    %144 = vmatprep.subr.mxu0 0.0
    %145 = vmatpush1.msra.mxu0 0.0
    %146 = vmatprep.subr.mxu0 0.0
    %147 = vmatpush1.msra.mxu0 0.0
    %148 = vmatprep.subr.mxu0 0.0
    %149 = vmatpush1.msra.mxu0 0.0
    %150 = vmatprep.subr.mxu0 0.0
    %151 = vmatpush1.msra.mxu0 0.0
    %152 = vmatprep.subr.mxu0 0.0
    %153 = vmatpush1.msra.mxu0 0.0
    %154 = vmatprep.subr.mxu0 0.0
    %155 = vmatpush1.msra.mxu0 0.0
    %156 = vmatprep.subr.mxu0 0.0
    %157 = vmatpush1.msra.mxu0 0.0
    %158 = vmatprep.subr.mxu0 0.0
    %159 = vmatpush1.msra.mxu0 0.0
    %160 = vmatprep.subr.mxu0 0.0
    %161 = vmatpush1.msra.mxu0 0.0
    %162 = vmatprep.subr.mxu0 0.0
    %163 = vmatpush1.msra.mxu0 0.0
    %164 = vmatprep.subr.mxu0 0.0
    %165 = vmatpush1.msra.mxu0 0.0
    %166 = vmatprep.subr.mxu0 0.0
    %167 = vmatpush1.msra.mxu0 0.0
    %168 = vmatprep.subr.mxu0 0.0
    %169 = vmatpush1.msra.mxu0 0.0
    %170 = vmatprep.subr.mxu0 0.0
    %171 = vmatpush1.msra.mxu0 0.0
    %172 = vmatprep.subr.mxu0 0.0
    %173 = vmatpush1.msra.mxu0 0.0
    %174 = vmatprep.subr.mxu0 0.0
    %175 = vmatpush1.msra.mxu0 0.0
    %176 = vmatprep.subr.mxu0 0.0
    %177 = vmatpush1.msra.mxu0 0.0
    %178 = vmatprep.subr.mxu0 0.0
    %179 = vmatpush1.msra.mxu0 0.0
    %180 = vmatprep.subr.mxu0 0.0
    %181 = vmatpush1.msra.mxu0 0.0
    %182 = vmatprep.subr.mxu0 0.0
    %183 = vmatpush1.msra.mxu0 0.0
    %184 = vmatprep.subr.mxu0 0.0
    %185 = vmatpush1.msra.mxu0 0.0
    %186 = vmatprep.subr.mxu0 0.0
    %187 = vmatpush1.msra.mxu0 0.0
    %188 = vmatprep.subr.mxu0 0.0
    %189 = vmatpush1.msra.mxu0 0.0
    %190 = vmatprep.mubr.f32.mxu0 0.0
    %191 = vmatmul.mubr.f32.gmra.mrb[0].mxu0 %v124
    %v192 = vpop.f32.mrb[0].mxu0
    %v193 = vadd.f32 0.0, %v192
    %v194 = vpop.f32.mrb[0].mxu0
    %v195 = vadd.f32 0.0, %v194
    %196 = vdwg.mxu0
    %v198 = vsel %vm122, %v103, 0
    %200 = vmatprep.subr.mxu0 %v107
    %201 = vmatpush1.msra.mxu0 %v106
    %202 = vmatprep.subr.mxu0 %v109
    %203 = vmatpush1.msra.mxu0 %v108
    %204 = vmatprep.subr.mxu0 %v111
    %205 = vmatpush1.msra.mxu0 %v110
    %206 = vmatprep.subr.mxu0 %v113
    %207 = vmatpush1.msra.mxu0 %v112
    %208 = vmatprep.subr.mxu0 0.0
    %209 = vmatpush1.msra.mxu0 0.0
    %210 = vmatprep.subr.mxu0 0.0
    %211 = vmatpush1.msra.mxu0 0.0
    %212 = vmatprep.subr.mxu0 0.0
    %213 = vmatpush1.msra.mxu0 0.0
    %214 = vmatprep.subr.mxu0 0.0
    %215 = vmatpush1.msra.mxu0 0.0
    %216 = vmatprep.subr.mxu0 0.0
    %217 = vmatpush1.msra.mxu0 0.0
    %218 = vmatprep.subr.mxu0 0.0
    %219 = vmatpush1.msra.mxu0 0.0
    %220 = vmatprep.subr.mxu0 0.0
    %221 = vmatpush1.msra.mxu0 0.0
    %222 = vmatprep.subr.mxu0 0.0
    %223 = vmatpush1.msra.mxu0 0.0
    %224 = vmatprep.subr.mxu0 0.0
    %225 = vmatpush1.msra.mxu0 0.0
    %226 = vmatprep.subr.mxu0 0.0
    %227 = vmatpush1.msra.mxu0 0.0
    %228 = vmatprep.subr.mxu0 0.0
    %229 = vmatpush1.msra.mxu0 0.0
    %230 = vmatprep.subr.mxu0 0.0
    %231 = vmatpush1.msra.mxu0 0.0
    %232 = vmatprep.subr.mxu0 0.0
    %233 = vmatpush1.msra.mxu0 0.0
    %234 = vmatprep.subr.mxu0 0.0
    %235 = vmatpush1.msra.mxu0 0.0
    %236 = vmatprep.subr.mxu0 0.0
    %237 = vmatpush1.msra.mxu0 0.0
    %238 = vmatprep.subr.mxu0 0.0
    %239 = vmatpush1.msra.mxu0 0.0
    %240 = vmatprep.subr.mxu0 0.0
    %241 = vmatpush1.msra.mxu0 0.0
    %242 = vmatprep.subr.mxu0 0.0
    %243 = vmatpush1.msra.mxu0 0.0
    %244 = vmatprep.subr.mxu0 0.0
    %245 = vmatpush1.msra.mxu0 0.0
    %246 = vmatprep.subr.mxu0 0.0
    %247 = vmatpush1.msra.mxu0 0.0
    %248 = vmatprep.subr.mxu0 0.0
    %249 = vmatpush1.msra.mxu0 0.0
    %250 = vmatprep.subr.mxu0 0.0
    %251 = vmatpush1.msra.mxu0 0.0
    %252 = vmatprep.subr.mxu0 0.0
    %253 = vmatpush1.msra.mxu0 0.0
    %254 = vmatprep.subr.mxu0 0.0
    %255 = vmatpush1.msra.mxu0 0.0
    %256 = vmatprep.subr.mxu0 0.0
    %257 = vmatpush1.msra.mxu0 0.0
    %258 = vmatprep.subr.mxu0 0.0
    %259 = vmatpush1.msra.mxu0 0.0
    %260 = vmatprep.subr.mxu0 0.0
    %261 = vmatpush1.msra.mxu0 0.0
    %262 = vmatprep.subr.mxu0 0.0
    %263 = vmatpush1.msra.mxu0 0.0
    %264 = vmatprep.mubr.f32.mxu0 0.0
    %265 = vmatmul.mubr.f32.gmra.mrb[0].mxu0 %v198
    %v266 = vpop.f32.mrb[0].mxu0
    %v267 = vadd.f32 %v193, %v266
    %v268 = vpop.f32.mrb[0].mxu0
    %v269 = vadd.f32 %v195, %v268
    %270 = vdwg.mxu0
    %v271 = vld [vmem:[#allocation11] sm:$0xff]
    %v272 = vld [vmem:[#allocation11 + $0x8] sm:$0xff]
    %v273 = vld [vmem:[#allocation11 + $0x10] sm:$0xff]
    %v274 = vld [vmem:[#allocation11 + $0x18] sm:$0xff]
    %v275 = vld [vmem:[#allocation11 + $0x20] sm:$0xff]
    %v276 = vld [vmem:[#allocation11 + $0x28] sm:$0xff]
    %v277 = vld [vmem:[#allocation11 + $0x30] sm:$0xff]
    %v278 = vld [vmem:[#allocation11 + $0x38] sm:$0xff]
    %v280 = vsel %vm122, %v105, 0
    %282 = vmatprep.subr.mxu0 %v272
    %283 = vmatpush1.msra.mxu0 %v271
    %284 = vmatprep.subr.mxu0 %v274
    %285 = vmatpush1.msra.mxu0 %v273
    %286 = vmatprep.subr.mxu0 %v276
    %287 = vmatpush1.msra.mxu0 %v275
    %288 = vmatprep.subr.mxu0 %v278
    %289 = vmatpush1.msra.mxu0 %v277
    %290 = vmatprep.subr.mxu0 0.0
    %291 = vmatpush1.msra.mxu0 0.0
    %292 = vmatprep.subr.mxu0 0.0
    %293 = vmatpush1.msra.mxu0 0.0
    %294 = vmatprep.subr.mxu0 0.0
    %295 = vmatpush1.msra.mxu0 0.0
    %296 = vmatprep.subr.mxu0 0.0
    %297 = vmatpush1.msra.mxu0 0.0
    %298 = vmatprep.subr.mxu0 0.0
    %299 = vmatpush1.msra.mxu0 0.0
    %300 = vmatprep.subr.mxu0 0.0
    %301 = vmatpush1.msra.mxu0 0.0
    %302 = vmatprep.subr.mxu0 0.0
    %303 = vmatpush1.msra.mxu0 0.0
    %304 = vmatprep.subr.mxu0 0.0
    %305 = vmatpush1.msra.mxu0 0.0
    %306 = vmatprep.subr.mxu0 0.0
    %307 = vmatpush1.msra.mxu0 0.0
    %308 = vmatprep.subr.mxu0 0.0
    %309 = vmatpush1.msra.mxu0 0.0
    %310 = vmatprep.subr.mxu0 0.0
    %311 = vmatpush1.msra.mxu0 0.0
    %312 = vmatprep.subr.mxu0 0.0
    %313 = vmatpush1.msra.mxu0 0.0
    %314 = vmatprep.subr.mxu0 0.0
    %315 = vmatpush1.msra.mxu0 0.0
    %316 = vmatprep.subr.mxu0 0.0
    %317 = vmatpush1.msra.mxu0 0.0
    %318 = vmatprep.subr.mxu0 0.0
    %319 = vmatpush1.msra.mxu0 0.0
    %320 = vmatprep.subr.mxu0 0.0
    %321 = vmatpush1.msra.mxu0 0.0
    %322 = vmatprep.subr.mxu0 0.0
    %323 = vmatpush1.msra.mxu0 0.0
    %324 = vmatprep.subr.mxu0 0.0
    %325 = vmatpush1.msra.mxu0 0.0
    %326 = vmatprep.subr.mxu0 0.0
    %327 = vmatpush1.msra.mxu0 0.0
    %328 = vmatprep.subr.mxu0 0.0
    %329 = vmatpush1.msra.mxu0 0.0
    %330 = vmatprep.subr.mxu0 0.0
    %331 = vmatpush1.msra.mxu0 0.0
    %332 = vmatprep.subr.mxu0 0.0
    %333 = vmatpush1.msra.mxu0 0.0
    %334 = vmatprep.subr.mxu0 0.0
    %335 = vmatpush1.msra.mxu0 0.0
    %336 = vmatprep.subr.mxu0 0.0
    %337 = vmatpush1.msra.mxu0 0.0
    %338 = vmatprep.subr.mxu0 0.0
    %339 = vmatpush1.msra.mxu0 0.0
    %340 = vmatprep.subr.mxu0 0.0
    %341 = vmatpush1.msra.mxu0 0.0
    %342 = vmatprep.subr.mxu0 0.0
    %343 = vmatpush1.msra.mxu0 0.0
    %344 = vmatprep.subr.mxu0 0.0
    %345 = vmatpush1.msra.mxu0 0.0
    %346 = vmatprep.mubr.f32.mxu0 0.0
    %347 = vmatmul.mubr.f32.gmra.mrb[0].mxu0 %v280
    %v348 = vpop.f32.mrb[0].mxu0
    %v349 = vadd.f32 0.0, %v348
    %v350 = vpop.f32.mrb[0].mxu0
    %v351 = vadd.f32 0.0, %v350
    %352 = vdwg.mxu0
    %v353 = vadd.f32 %v267, %v349
    %v354 = vadd.f32 %v269, %v351
    %v355 = vld [vmem:[%s6] sm:$0xf]
    %v356 = vlaneseq
    %v357 = vshrl.u32 %v356, 7
    %v358 = vsub.s32 0, %v357
    %v359 = vrot.slane %v355, %v358
    %v360 = vadd.f32 %v353, %v359
    %v361 = vxor.u32 %v360, 2147483648
    %v362 = vmul.f32 %v361, 1.442695
    %v363 = vpow.pop %v362
    %v364 = vadd.f32 %v363, 1.0
    %v365 = vrcp.pop %v364
    %v366 = vmul.f32 1.0, %v365
    %v367 = vlaneseq
    %v368 = vshrl.u32 %v367, 7
    %v369 = vsub.s32 1, %v368
    %v370 = vrot.slane %v355, %v369
    %v371 = vadd.f32 %v354, %v370
    %372 = vadd.xlane.f32.xlu0 %v371
    %v373 = vpop.xlane.xlu0 %372
    %v374 = vmul.f32 %v373, 0.010416667
    %v375 = vmul.f32 %v371, %v371
    %376 = vadd.xlane.f32.xlu0 %v375
    %v377 = vpop.xlane.xlu0 %376
    %v378 = vmul.f32 %v377, 0.010416667
    %v379 = vmul.f32 %v374, %v374
    %v380 = vsub.f32 %v378, %v379
    %v381 = vmax.f32 %v380, 0.0
    %v382 = vsub.f32 %v371, %v374
    %v383 = vadd.f32 %v381, 1e-05
    %v384 = vrsqrt.pop %v383
    %v385 = vmul.f32 %v382, %v384
    %v386 = vlaneseq
    %v387 = vshrl.u32 %v386, 7
    %v388 = vsub.s32 2, %v387
    %v389 = vrot.slane %v355, %v388
    %v390 = vmul.f32 %v385, %v389
    %v391 = vlaneseq
    %v392 = vshrl.u32 %v391, 7
    %v393 = vsub.s32 3, %v392
    %v394 = vrot.slane %v355, %v393
    %v395 = vadd.f32 %v390, %v394
    %v396 = vmul.f32 %v395, 0.5
    %v397 = vmul.f32 %v395, 0.70710677
    %v398 = verf.f32.pop %v397
    %v399 = vadd.f32 %v398, 1.0
    %v400 = vmul.f32 %v396, %v399
    %v401 = vmul.f32 %v366, %v400
    %402 = vst [vmem:[#allocation13] sm:$0xff] %v401
    // Predicated region
    $region54: #{tpu_custom_call.1} parent=1 // pred_check
      _
    $region55: #{tpu_custom_call.1} parent=1 // pred_check_branch
      %404 = sbr.rel (0) target = $region57
    $region56: #{tpu_custom_call.1} parent=1 // pred_region
      %s406 = ssub.s32 128, 128
      %407 = vsyncadd [#allocation4], %s406
      %s409 = sshll.u32 [#allocation13], 4
      %s410 = int_to_ptr.vmem [resolvable:$true] %s409
      %412 = dma.vmem_to_hbm [thread:$0]  %s410, 128, %s7, [#allocation4]
    $region57: #{tpu_custom_call.1} parent=1 // pred_fallthru
      _
    // Predicated region
    $region58: #{tpu_custom_call.1} parent=1 // pred_check
      _
    $region59: #{tpu_custom_call.1} parent=1 // pred_check_branch
      %414 = sbr.rel (0) target = $region61
    $region60: #{tpu_custom_call.1} parent=1 // pred_region
      %415 = dma.done [#allocation4], 128
    $region61: #{tpu_custom_call.1} parent=1 // pred_fallthru
      _
    %416 = vsyncpa [#allocation3], 1
    %417 = vsyncpa [#allocation6], 1
    %418 = vsyncpa [#allocation9], 1
    %419 = vsyncpa [#allocation12], 1
    %420 = vsyncpa [#allocation4], 1

// kernel: tpu_custom_call.1
$region0: #{tpu_custom_call.1}
  #allocation0 [shape = 'u32[]', space=smem, size = 0x4, offset = 0x4, fixed_abs, tag = 'smem constant byte address 0x4 - core index']
  #allocation1 [shape = 'u32[144,128]{1,0:T(1,128)}', space=vmem, size = 0x12000, scoped, tag = 'internal scratch']
  %s0 = inlined_call_operand.hbm [shape: f32[8,32], index: 0, kind: input, shape index: {}]
  %s1 = inlined_call_operand.hbm [shape: f32[8,32], index: 1, kind: input, shape index: {}]
  %s2 = inlined_call_operand.hbm [shape: f32[8,32], index: 2, kind: input, shape index: {}]
  %s3 = inlined_call_operand.hbm [shape: f32[32,256], index: 3, kind: input, shape index: {}]
  %s4 = inlined_call_operand.hbm [shape: f32[32,256], index: 4, kind: input, shape index: {}]
  %s5 = inlined_call_operand.hbm [shape: f32[32,256], index: 5, kind: input, shape index: {}]
  %s6 = inlined_call_operand.vmem [shape: f32[4,128], index: 6, kind: input, shape index: {}]
  %s7 = inlined_call_operand.hbm [shape: f32[8,128], index: 7, kind: output, shape index: {}]
  %s8 = sld [smem:[#allocation0]]
  $region62: #{tpu_custom_call.1} parent=0
    _
  %s10 = ssub.s32 1, %s8
  %s11 = scalar_select 0, %s10, %s8
  $region1: #{tpu_custom_call.1} parent=0
    #allocation2 [shape = 'u8[4096]{0}', space=vmem, size = 0x1000, scoped, tag = 'input window, operand 0, single buffered']
    #allocation3 [shape = 's32[1]{0}', space=sflag, size = 0x4, scoped, tag = 'scoped memory for tpu_custom_call.1']
    #allocation4 [shape = 's32[1]{0}', space=sflag, size = 0x4, scoped, tag = 'scoped memory for tpu_custom_call.1']
    #allocation5 [shape = 'u8[4096]{0}', space=vmem, size = 0x1000, scoped, tag = 'input window, operand 1, single buffered']
    #allocation6 [shape = 's32[1]{0}', space=sflag, size = 0x4, scoped, tag = 'scoped memory for tpu_custom_call.1']
    #allocation7 [shape = 'u8[4096]{0}', space=vmem, size = 0x1000, scoped, tag = 'input window, operand 2, single buffered']
    #allocation8 [shape = 'u8[32768]{0}', space=vmem, size = 0x8000, scoped, tag = 'input window, operand 3, single buffered']
    #allocation9 [shape = 's32[1]{0}', space=sflag, size = 0x4, scoped, tag = 'scoped memory for tpu_custom_call.1']
    #allocation10 [shape = 'u8[32768]{0}', space=vmem, size = 0x8000, scoped, tag = 'input window, operand 4, single buffered']
    #allocation11 [shape = 'u8[32768]{0}', space=vmem, size = 0x8000, scoped, tag = 'input window, operand 5, single buffered']
    #allocation12 [shape = 's32[1]{0}', space=sflag, size = 0x4, scoped, tag = 'scoped memory for tpu_custom_call.1']
    #allocation13 [shape = 'u8[4096]{0}', space=vmem, size = 0x1000, scoped, tag = 'output window, operand 0, single buffered']
    %12 = vsyncpa [#allocation3], 0
    %13 = vsyncpa [#allocation6], 0
    %14 = vsyncpa [#allocation9], 0
    %15 = vsyncpa [#allocation12], 0
    %16 = vsyncpa [#allocation4], 0
    // Predicated region
    $region2: #{tpu_custom_call.1} parent=1 // pred_check
      _
    $region3: #{tpu_custom_call.1} parent=1 // pred_check_branch
      %18 = sbr.rel (0) target = $region5
    $region4: #{tpu_custom_call.1} parent=1 // pred_region
      %s20 = ssub.s32 128, 128
      %21 = vsyncadd [#allocation3], %s20
      %s23 = sshll.u32 [#allocation2], 4
      %s24 = int_to_ptr.vmem [resolvable:$true] %s23
      %26 = dma.hbm_to_vmem [thread:$0]  %s0, 128, %s24, [#allocation3]
    $region5: #{tpu_custom_call.1} parent=1 // pred_fallthru
      _
    // Predicated region
    $region6: #{tpu_custom_call.1} parent=1 // pred_check
      _
    $region7: #{tpu_custom_call.1} parent=1 // pred_check_branch
      %28 = sbr.rel (0) target = $region9
    $region8: #{tpu_custom_call.1} parent=1 // pred_region
      %s30 = ssub.s32 128, 128
      %31 = vsyncadd [#allocation6], %s30
      %s33 = sshll.u32 [#allocation5], 4
      %s34 = int_to_ptr.vmem [resolvable:$true] %s33
      %36 = dma.hbm_to_vmem [thread:$0]  %s1, 128, %s34, [#allocation6]
    $region9: #{tpu_custom_call.1} parent=1 // pred_fallthru
      _
    // Predicated region
    $region10: #{tpu_custom_call.1} parent=1 // pred_check
      _
    $region11: #{tpu_custom_call.1} parent=1 // pred_check_branch
      %38 = sbr.rel (0) target = $region13
    $region12: #{tpu_custom_call.1} parent=1 // pred_region
      %s40 = ssub.s32 128, 128
      %41 = vsyncadd [#allocation6], %s40
      %s43 = sshll.u32 [#allocation7], 4
      %s44 = int_to_ptr.vmem [resolvable:$true] %s43
      %46 = dma.hbm_to_vmem [thread:$0]  %s2, 128, %s44, [#allocation6]
    $region13: #{tpu_custom_call.1} parent=1 // pred_fallthru
      _
    // Predicated region
    $region14: #{tpu_custom_call.1} parent=1 // pred_check
      _
    $region15: #{tpu_custom_call.1} parent=1 // pred_check_branch
      %48 = sbr.rel (0) target = $region17
    $region16: #{tpu_custom_call.1} parent=1 // pred_region
      %s50 = ssub.s32 1024, 1024
      %51 = vsyncadd [#allocation9], %s50
      %s52 = sshll.u32 [#allocation8], 4
      %s53 = int_to_ptr.vmem [resolvable:$true] %s52
      %58 = dma.hbm_to_vmem [thread:$0]  %s3, 1024, %s53, [#allocation9], 256, 256, 16
    $region17: #{tpu_custom_call.1} parent=1 // pred_fallthru
      _
    // Predicated region
    $region18: #{tpu_custom_call.1} parent=1 // pred_check
      _
    $region19: #{tpu_custom_call.1} parent=1 // pred_check_branch
      %60 = sbr.rel (0) target = $region21
    $region20: #{tpu_custom_call.1} parent=1 // pred_region
      %s62 = ssub.s32 1024, 1024
      %63 = vsyncadd [#allocation9], %s62
      %s64 = sshll.u32 [#allocation10], 4
      %s65 = int_to_ptr.vmem [resolvable:$true] %s64
      %70 = dma.hbm_to_vmem [thread:$0]  %s4, 1024, %s65, [#allocation9], 256, 256, 16
    $region21: #{tpu_custom_call.1} parent=1 // pred_fallthru
      _
    // Predicated region
    $region22: #{tpu_custom_call.1} parent=1 // pred_check
      _
    $region23: #{tpu_custom_call.1} parent=1 // pred_check_branch
      %72 = sbr.rel (0) target = $region25
    $region24: #{tpu_custom_call.1} parent=1 // pred_region
      %s74 = ssub.s32 1024, 1024
      %75 = vsyncadd [#allocation12], %s74
      %s76 = sshll.u32 [#allocation11], 4
      %s77 = int_to_ptr.vmem [resolvable:$true] %s76
      %82 = dma.hbm_to_vmem [thread:$0]  %s5, 1024, %s77, [#allocation12], 256, 256, 16
    $region25: #{tpu_custom_call.1} parent=1 // pred_fallthru
      _
    // Predicated region
    $region26: #{tpu_custom_call.1} parent=1 // pred_check
      _
    $region27: #{tpu_custom_call.1} parent=1 // pred_check_branch
      %84 = sbr.rel (0) target = $region29
    $region28: #{tpu_custom_call.1} parent=1 // pred_region
      _
    $region29: #{tpu_custom_call.1} parent=1 // pred_fallthru
      _
    // Predicated region
    $region30: #{tpu_custom_call.1} parent=1 // pred_check
      _
    $region31: #{tpu_custom_call.1} parent=1 // pred_check_branch
      %86 = sbr.rel (0) target = $region33
    $region32: #{tpu_custom_call.1} parent=1 // pred_region
      %87 = dma.done [#allocation3], 128
    $region33: #{tpu_custom_call.1} parent=1 // pred_fallthru
      _
    // Predicated region
    $region34: #{tpu_custom_call.1} parent=1 // pred_check
      _
    $region35: #{tpu_custom_call.1} parent=1 // pred_check_branch
      %89 = sbr.rel (0) target = $region37
    $region36: #{tpu_custom_call.1} parent=1 // pred_region
      %90 = dma.done [#allocation6], 128
    $region37: #{tpu_custom_call.1} parent=1 // pred_fallthru
      _
    // Predicated region
    $region38: #{tpu_custom_call.1} parent=1 // pred_check
      _
    $region39: #{tpu_custom_call.1} parent=1 // pred_check_branch
      %92 = sbr.rel (0) target = $region41
    $region40: #{tpu_custom_call.1} parent=1 // pred_region
      %93 = dma.done [#allocation6], 128
    $region41: #{tpu_custom_call.1} parent=1 // pred_fallthru
      _
    // Predicated region
    $region42: #{tpu_custom_call.1} parent=1 // pred_check
      _
    $region43: #{tpu_custom_call.1} parent=1 // pred_check_branch
      %95 = sbr.rel (0) target = $region45
    $region44: #{tpu_custom_call.1} parent=1 // pred_region
      %96 = dma.done [#allocation9], 1024
    $region45: #{tpu_custom_call.1} parent=1 // pred_fallthru
      _
    // Predicated region
    $region46: #{tpu_custom_call.1} parent=1 // pred_check
      _
    $region47: #{tpu_custom_call.1} parent=1 // pred_check_branch
      %98 = sbr.rel (0) target = $region49
    $region48: #{tpu_custom_call.1} parent=1 // pred_region
      %99 = dma.done [#allocation9], 1024
    $region49: #{tpu_custom_call.1} parent=1 // pred_fallthru
      _
    // Predicated region
    $region50: #{tpu_custom_call.1} parent=1 // pred_check
      _
    $region51: #{tpu_custom_call.1} parent=1 // pred_check_branch
      %101 = sbr.rel (0) target = $region53
    $region52: #{tpu_custom_call.1} parent=1 // pred_region
      %102 = dma.done [#allocation12], 1024
    $region53: #{tpu_custom_call.1} parent=1 // pred_fallthru
      _
    %v103 = vld [vmem:[#allocation2] sm:$0xff]
    %v104 = vld [vmem:[#allocation5] sm:$0xff]
    %v105 = vld [vmem:[#allocation7] sm:$0xff]
    %v106 = vld [vmem:[#allocation8] sm:$0xff]
    %v107 = vld [vmem:[#allocation8 + $0x8] sm:$0xff]
    %v108 = vld [vmem:[#allocation8 + $0x10] sm:$0xff]
    %v109 = vld [vmem:[#allocation8 + $0x18] sm:$0xff]
    %v110 = vld [vmem:[#allocation8 + $0x20] sm:$0xff]
    %v111 = vld [vmem:[#allocation8 + $0x28] sm:$0xff]
    %v112 = vld [vmem:[#allocation8 + $0x30] sm:$0xff]
    %v113 = vld [vmem:[#allocation8 + $0x38] sm:$0xff]
    %v114 = vld [vmem:[#allocation10] sm:$0xff]
    %v115 = vld [vmem:[#allocation10 + $0x8] sm:$0xff]
    %v116 = vld [vmem:[#allocation10 + $0x10] sm:$0xff]
    %v117 = vld [vmem:[#allocation10 + $0x18] sm:$0xff]
    %v118 = vld [vmem:[#allocation10 + $0x20] sm:$0xff]
    %v119 = vld [vmem:[#allocation10 + $0x28] sm:$0xff]
    %v120 = vld [vmem:[#allocation10 + $0x30] sm:$0xff]
    %v121 = vld [vmem:[#allocation10 + $0x38] sm:$0xff]
    %vm122 = vcmask 261120
    %v124 = vsel %vm122, %v104, 0
    %126 = vmatprep.subr.mxu0 %v115
    %127 = vmatpush1.msra.mxu0 %v114
    %128 = vmatprep.subr.mxu0 %v117
    %129 = vmatpush1.msra.mxu0 %v116
    %130 = vmatprep.subr.mxu0 %v119
    %131 = vmatpush1.msra.mxu0 %v118
    %132 = vmatprep.subr.mxu0 %v121
    %133 = vmatpush1.msra.mxu0 %v120
    %134 = vmatprep.subr.mxu0 0.0
    %135 = vmatpush1.msra.mxu0 0.0
    %136 = vmatprep.subr.mxu0 0.0
    %137 = vmatpush1.msra.mxu0 0.0
    %138 = vmatprep.subr.mxu0 0.0
    %139 = vmatpush1.msra.mxu0 0.0
    %140 = vmatprep.subr.mxu0 0.0
    %141 = vmatpush1.msra.mxu0 0.0
    %142 = vmatprep.subr.mxu0 0.0
    %143 = vmatpush1.msra.mxu0 0.0
    %144 = vmatprep.subr.mxu0 0.0
    %145 = vmatpush1.msra.mxu0 0.0
    %146 = vmatprep.subr.mxu0 0.0
    %147 = vmatpush1.msra.mxu0 0.0
    %148 = vmatprep.subr.mxu0 0.0
    %149 = vmatpush1.msra.mxu0 0.0
    %150 = vmatprep.subr.mxu0 0.0
    %151 = vmatpush1.msra.mxu0 0.0
    %152 = vmatprep.subr.mxu0 0.0
    %153 = vmatpush1.msra.mxu0 0.0
    %154 = vmatprep.subr.mxu0 0.0
    %155 = vmatpush1.msra.mxu0 0.0
    %156 = vmatprep.subr.mxu0 0.0
    %157 = vmatpush1.msra.mxu0 0.0
    %158 = vmatprep.subr.mxu0 0.0
    %159 = vmatpush1.msra.mxu0 0.0
    %160 = vmatprep.subr.mxu0 0.0
    %161 = vmatpush1.msra.mxu0 0.0
    %162 = vmatprep.subr.mxu0 0.0
    %163 = vmatpush1.msra.mxu0 0.0
    %164 = vmatprep.subr.mxu0 0.0
    %165 = vmatpush1.msra.mxu0 0.0
    %166 = vmatprep.subr.mxu0 0.0
    %167 = vmatpush1.msra.mxu0 0.0
    %168 = vmatprep.subr.mxu0 0.0
    %169 = vmatpush1.msra.mxu0 0.0
    %170 = vmatprep.subr.mxu0 0.0
    %171 = vmatpush1.msra.mxu0 0.0
    %172 = vmatprep.subr.mxu0 0.0
    %173 = vmatpush1.msra.mxu0 0.0
    %174 = vmatprep.subr.mxu0 0.0
    %175 = vmatpush1.msra.mxu0 0.0
    %176 = vmatprep.subr.mxu0 0.0
    %177 = vmatpush1.msra.mxu0 0.0
    %178 = vmatprep.subr.mxu0 0.0
    %179 = vmatpush1.msra.mxu0 0.0
    %180 = vmatprep.subr.mxu0 0.0
    %181 = vmatpush1.msra.mxu0 0.0
    %182 = vmatprep.subr.mxu0 0.0
    %183 = vmatpush1.msra.mxu0 0.0
    %184 = vmatprep.subr.mxu0 0.0
    %185 = vmatpush1.msra.mxu0 0.0
    %186 = vmatprep.subr.mxu0 0.0
    %187 = vmatpush1.msra.mxu0 0.0
    %188 = vmatprep.subr.mxu0 0.0
    %189 = vmatpush1.msra.mxu0 0.0
    %190 = vmatprep.mubr.f32.mxu0 0.0
    %191 = vmatmul.mubr.f32.gmra.mrb[0].mxu0 %v124
    %v192 = vpop.f32.mrb[0].mxu0
    %v193 = vadd.f32 0.0, %v192
    %v194 = vpop.f32.mrb[0].mxu0
    %v195 = vadd.f32 0.0, %v194
    %196 = vdwg.mxu0
    %v198 = vsel %vm122, %v103, 0
    %200 = vmatprep.subr.mxu0 %v107
    %201 = vmatpush1.msra.mxu0 %v106
    %202 = vmatprep.subr.mxu0 %v109
    %203 = vmatpush1.msra.mxu0 %v108
    %204 = vmatprep.subr.mxu0 %v111
    %205 = vmatpush1.msra.mxu0 %v110
    %206 = vmatprep.subr.mxu0 %v113
    %207 = vmatpush1.msra.mxu0 %v112
    %208 = vmatprep.subr.mxu0 0.0
    %209 = vmatpush1.msra.mxu0 0.0
    %210 = vmatprep.subr.mxu0 0.0
    %211 = vmatpush1.msra.mxu0 0.0
    %212 = vmatprep.subr.mxu0 0.0
    %213 = vmatpush1.msra.mxu0 0.0
    %214 = vmatprep.subr.mxu0 0.0
    %215 = vmatpush1.msra.mxu0 0.0
    %216 = vmatprep.subr.mxu0 0.0
    %217 = vmatpush1.msra.mxu0 0.0
    %218 = vmatprep.subr.mxu0 0.0
    %219 = vmatpush1.msra.mxu0 0.0
    %220 = vmatprep.subr.mxu0 0.0
    %221 = vmatpush1.msra.mxu0 0.0
    %222 = vmatprep.subr.mxu0 0.0
    %223 = vmatpush1.msra.mxu0 0.0
    %224 = vmatprep.subr.mxu0 0.0
    %225 = vmatpush1.msra.mxu0 0.0
    %226 = vmatprep.subr.mxu0 0.0
    %227 = vmatpush1.msra.mxu0 0.0
    %228 = vmatprep.subr.mxu0 0.0
    %229 = vmatpush1.msra.mxu0 0.0
    %230 = vmatprep.subr.mxu0 0.0
    %231 = vmatpush1.msra.mxu0 0.0
    %232 = vmatprep.subr.mxu0 0.0
    %233 = vmatpush1.msra.mxu0 0.0
    %234 = vmatprep.subr.mxu0 0.0
    %235 = vmatpush1.msra.mxu0 0.0
    %236 = vmatprep.subr.mxu0 0.0
    %237 = vmatpush1.msra.mxu0 0.0
    %238 = vmatprep.subr.mxu0 0.0
    %239 = vmatpush1.msra.mxu0 0.0
    %240 = vmatprep.subr.mxu0 0.0
    %241 = vmatpush1.msra.mxu0 0.0
    %242 = vmatprep.subr.mxu0 0.0
    %243 = vmatpush1.msra.mxu0 0.0
    %244 = vmatprep.subr.mxu0 0.0
    %245 = vmatpush1.msra.mxu0 0.0
    %246 = vmatprep.subr.mxu0 0.0
    %247 = vmatpush1.msra.mxu0 0.0
    %248 = vmatprep.subr.mxu0 0.0
    %249 = vmatpush1.msra.mxu0 0.0
    %250 = vmatprep.subr.mxu0 0.0
    %251 = vmatpush1.msra.mxu0 0.0
    %252 = vmatprep.subr.mxu0 0.0
    %253 = vmatpush1.msra.mxu0 0.0
    %254 = vmatprep.subr.mxu0 0.0
    %255 = vmatpush1.msra.mxu0 0.0
    %256 = vmatprep.subr.mxu0 0.0
    %257 = vmatpush1.msra.mxu0 0.0
    %258 = vmatprep.subr.mxu0 0.0
    %259 = vmatpush1.msra.mxu0 0.0
    %260 = vmatprep.subr.mxu0 0.0
    %261 = vmatpush1.msra.mxu0 0.0
    %262 = vmatprep.subr.mxu0 0.0
    %263 = vmatpush1.msra.mxu0 0.0
    %264 = vmatprep.mubr.f32.mxu0 0.0
    %265 = vmatmul.mubr.f32.gmra.mrb[0].mxu0 %v198
    %v266 = vpop.f32.mrb[0].mxu0
    %v267 = vadd.f32 %v193, %v266
    %v268 = vpop.f32.mrb[0].mxu0
    %v269 = vadd.f32 %v195, %v268
    %270 = vdwg.mxu0
    %v271 = vld [vmem:[#allocation11] sm:$0xff]
    %v272 = vld [vmem:[#allocation11 + $0x8] sm:$0xff]
    %v273 = vld [vmem:[#allocation11 + $0x10] sm:$0xff]
    %v274 = vld [vmem:[#allocation11 + $0x18] sm:$0xff]
    %v275 = vld [vmem:[#allocation11 + $0x20] sm:$0xff]
    %v276 = vld [vmem:[#allocation11 + $0x28] sm:$0xff]
    %v277 = vld [vmem:[#allocation11 + $0x30] sm:$0xff]
    %v278 = vld [vmem:[#allocation11 + $0x38] sm:$0xff]
    %v280 = vsel %vm122, %v105, 0
    %282 = vmatprep.subr.mxu0 %v272
    %283 = vmatpush1.msra.mxu0 %v271
    %284 = vmatprep.subr.mxu0 %v274
    %285 = vmatpush1.msra.mxu0 %v273
    %286 = vmatprep.subr.mxu0 %v276
    %287 = vmatpush1.msra.mxu0 %v275
    %288 = vmatprep.subr.mxu0 %v278
    %289 = vmatpush1.msra.mxu0 %v277
    %290 = vmatprep.subr.mxu0 0.0
    %291 = vmatpush1.msra.mxu0 0.0
    %292 = vmatprep.subr.mxu0 0.0
    %293 = vmatpush1.msra.mxu0 0.0
    %294 = vmatprep.subr.mxu0 0.0
    %295 = vmatpush1.msra.mxu0 0.0
    %296 = vmatprep.subr.mxu0 0.0
    %297 = vmatpush1.msra.mxu0 0.0
    %298 = vmatprep.subr.mxu0 0.0
    %299 = vmatpush1.msra.mxu0 0.0
    %300 = vmatprep.subr.mxu0 0.0
    %301 = vmatpush1.msra.mxu0 0.0
    %302 = vmatprep.subr.mxu0 0.0
    %303 = vmatpush1.msra.mxu0 0.0
    %304 = vmatprep.subr.mxu0 0.0
    %305 = vmatpush1.msra.mxu0 0.0
    %306 = vmatprep.subr.mxu0 0.0
    %307 = vmatpush1.msra.mxu0 0.0
    %308 = vmatprep.subr.mxu0 0.0
    %309 = vmatpush1.msra.mxu0 0.0
    %310 = vmatprep.subr.mxu0 0.0
    %311 = vmatpush1.msra.mxu0 0.0
    %312 = vmatprep.subr.mxu0 0.0
    %313 = vmatpush1.msra.mxu0 0.0
    %314 = vmatprep.subr.mxu0 0.0
    %315 = vmatpush1.msra.mxu0 0.0
    %316 = vmatprep.subr.mxu0 0.0
    %317 = vmatpush1.msra.mxu0 0.0
    %318 = vmatprep.subr.mxu0 0.0
    %319 = vmatpush1.msra.mxu0 0.0
    %320 = vmatprep.subr.mxu0 0.0
    %321 = vmatpush1.msra.mxu0 0.0
    %322 = vmatprep.subr.mxu0 0.0
    %323 = vmatpush1.msra.mxu0 0.0
    %324 = vmatprep.subr.mxu0 0.0
    %325 = vmatpush1.msra.mxu0 0.0
    %326 = vmatprep.subr.mxu0 0.0
    %327 = vmatpush1.msra.mxu0 0.0
    %328 = vmatprep.subr.mxu0 0.0
    %329 = vmatpush1.msra.mxu0 0.0
    %330 = vmatprep.subr.mxu0 0.0
    %331 = vmatpush1.msra.mxu0 0.0
    %332 = vmatprep.subr.mxu0 0.0
    %333 = vmatpush1.msra.mxu0 0.0
    %334 = vmatprep.subr.mxu0 0.0
    %335 = vmatpush1.msra.mxu0 0.0
    %336 = vmatprep.subr.mxu0 0.0
    %337 = vmatpush1.msra.mxu0 0.0
    %338 = vmatprep.subr.mxu0 0.0
    %339 = vmatpush1.msra.mxu0 0.0
    %340 = vmatprep.subr.mxu0 0.0
    %341 = vmatpush1.msra.mxu0 0.0
    %342 = vmatprep.subr.mxu0 0.0
    %343 = vmatpush1.msra.mxu0 0.0
    %344 = vmatprep.subr.mxu0 0.0
    %345 = vmatpush1.msra.mxu0 0.0
    %346 = vmatprep.mubr.f32.mxu0 0.0
    %347 = vmatmul.mubr.f32.gmra.mrb[0].mxu0 %v280
    %v348 = vpop.f32.mrb[0].mxu0
    %v349 = vadd.f32 0.0, %v348
    %v350 = vpop.f32.mrb[0].mxu0
    %v351 = vadd.f32 0.0, %v350
    %352 = vdwg.mxu0
    %v353 = vadd.f32 %v267, %v349
    %v354 = vadd.f32 %v269, %v351
    %v355 = vld [vmem:[%s6] sm:$0xf]
    %v356 = vlaneseq
    %v357 = vshrl.u32 %v356, 7
    %v358 = vsub.s32 0, %v357
    %v359 = vrot.slane %v355, %v358
    %v360 = vadd.f32 %v353, %v359
    %v361 = vxor.u32 %v360, 2147483648
    %v362 = vmul.f32 %v361, 1.442695
    %v363 = vpow.pop %v362
    %v364 = vadd.f32 %v363, 1.0
    %v365 = vrcp.pop %v364
    %v366 = vmul.f32 1.0, %v365
    %v367 = vlaneseq
    %v368 = vshrl.u32 %v367, 7
    %v369 = vsub.s32 1, %v368
    %v370 = vrot.slane %v355, %v369
    %v371 = vadd.f32 %v354, %v370
    %372 = vadd.xlane.f32.xlu0 %v371
    %v373 = vpop.xlane.xlu0 %372
    %v374 = vmul.f32 %v373, 0.010416667
    %v375 = vmul.f32 %v371, %v371
    %376 = vadd.xlane.f32.xlu0 %v375
    %v377 = vpop.xlane.xlu0 %376
    %v378 = vmul.f32 %v377, 0.010416667
    %v379 = vmul.f32 %v374, %v374
    %v380 = vsub.f32 %v378, %v379
    %v381 = vmax.f32 %v380, 0.0
    %v382 = vsub.f32 %v371, %v374
    %v383 = vadd.f32 %v381, 1e-05
    %v384 = vrsqrt.pop %v383
    %v385 = vmul.f32 %v382, %v384
    %v386 = vlaneseq
    %v387 = vshrl.u32 %v386, 7
    %v388 = vsub.s32 2, %v387
    %v389 = vrot.slane %v355, %v388
    %v390 = vmul.f32 %v385, %v389
    %v391 = vlaneseq
    %v392 = vshrl.u32 %v391, 7
    %v393 = vsub.s32 3, %v392
    %v394 = vrot.slane %v355, %v393
    %v395 = vadd.f32 %v390, %v394
    %v396 = vmul.f32 %v395, 0.5
    %v397 = vmul.f32 %v395, 0.70710677
    %v398 = verf.f32.pop %v397
    %v399 = vadd.f32 %v398, 1.0
    %v400 = vmul.f32 %v396, %v399
    %v401 = vmul.f32 %v366, %v400
    %402 = vst [vmem:[#allocation13] sm:$0xff] %v401
    // Predicated region
    $region54: #{tpu_custom_call.1} parent=1 // pred_check
      _
    $region55: #{tpu_custom_call.1} parent=1 // pred_check_branch
      %404 = sbr.rel (0) target = $region57
    $region56: #{tpu_custom_call.1} parent=1 // pred_region
      %s406 = ssub.s32 128, 128
      %407 = vsyncadd [#allocation4], %s406
      %s409 = sshll.u32 [#allocation13], 4
      %s410 = int_to_ptr.vmem [resolvable:$true] %s409
      %412 = dma.vmem_to_hbm [thread:$0]  %s410, 128, %s7, [#allocation4]
    $region57: #{tpu_custom_call.1} parent=1 // pred_fallthru
      _
    // Predicated region
    $region58: #{tpu_custom_call.1} parent=1 // pred_check
      _
    $region59: #{tpu_custom_call.1} parent=1 // pred_check_branch
      %414 = sbr.rel (0) target = $region61
    $region60: #{tpu_custom_call.1} parent=1 // pred_region
      %415 = dma.done [#allocation4], 128
    $region61: #{tpu_custom_call.1} parent=1 // pred_fallthru
      _
    %416 = vsyncpa [#allocation3], 1
    %417 = vsyncpa [#allocation6], 1
    %418 = vsyncpa [#allocation9], 1
    %419 = vsyncpa [#allocation12], 1
    %420 = vsyncpa [#allocation4], 1

</llo_original>
